<compile_context>
chip_gen: v7x
topology: tpu7x:2x2x1
jax: 0.10.0
libtpu: 0.0.40
codegen_flags: <defaults>
</compile_context>

<pallas_src>
import numpy as np
import jax
import jax.numpy as jnp
from jax import lax
from jax.experimental import pallas as pl
from jax.experimental.pallas import tpu as pltpu

LMBDA = 1.0   # lmbda=1 in Semisup_Loss.__init__
EPS = 1e-8


def _pick_tile(dim, desired, multiple):
    """Largest tile <= desired that divides dim and is a multiple of `multiple`.
    Falls back to the full dim (always a legal block)."""
    if dim <= desired:
        return dim
    t = (desired // multiple) * multiple
    while t >= multiple:
        if dim % t == 0:
            return t
        t -= multiple
    return dim


def _vmem_limit(est_bytes):
    # Generous floor (estimate ignores Mosaic-internal scratch); cap at v7x's 64 MiB.
    return int(min(max(2 * est_bytes, 32 << 20), 64 << 20))


# ---------------------------------------------------------------------------
# Pass 1: P_ST = softmax(B @ A^T, dim=1), tiled over row-blocks of B.
# ---------------------------------------------------------------------------
def pst_kernel(b_ref, at_ref, pst_ref):
    # [TM, D] @ [D, N] -> [TM, N]   (MXU: bf16 in, f32 accumulation)
    msim_t = lax.dot_general(b_ref[...], at_ref[...], (((1,), (0,)), ((), ())),
                             preferred_element_type=jnp.float32)
    m = jnp.max(msim_t, axis=1, keepdims=True)
    e = jnp.exp(msim_t - m)
    p_st = e / jnp.sum(e, axis=1, keepdims=True)
    pst_ref[...] = p_st.astype(pst_ref.dtype)


# ---------------------------------------------------------------------------
# Pass 2: per row-block of A — P_TS, P_TST, p_target, walker/visit partials.
# ---------------------------------------------------------------------------
def walker_kernel(a_ref, bt_ref, pst_ref, lrow_ref, lcol_ref,
                  ptst_ref, ptgt_ref, walker_ref, visit_ref):
    # Msim block: [TN, D] @ [D, M] -> [TN, M]
    msim = lax.dot_general(a_ref[...], bt_ref[...], (((1,), (0,)), ((), ())),
                           preferred_element_type=jnp.float32)
    m = jnp.max(msim, axis=1, keepdims=True)
    e = jnp.exp(msim - m)
    p_ts = e / jnp.sum(e, axis=1, keepdims=True)                 # f32 [TN, M]

    # P_TST block: [TN, M] @ [M, N] -> [TN, N]  (RHS-native contraction on MXU)
    p_tst = lax.dot_general(p_ts.astype(pst_ref.dtype), pst_ref[...],
                            (((1,), (0,)), ((), ())),
                            preferred_element_type=jnp.float32)

    # p_target block: equality matrix / row-sum.  (f32 label compare is exact
    # for class ids < 2^24.)
    eq = (lcol_ref[...] == lrow_ref[...]).astype(jnp.float32)    # [TN, N]
    p_target = eq / jnp.sum(eq, axis=1, keepdims=True)

    # Walker partial.  softmax(log(x+eps), dim=1) == (x+eps)/rowsum(x+eps), so
    # log(softmax(log(x+eps))) == log(x+eps) - log(rowsum(x+eps)): no exp needed.
    pt = p_tst + EPS
    log_sm = jnp.log(pt) - jnp.log(jnp.sum(pt, axis=1, keepdims=True))
    walker_ref[0, 0, 0] = jnp.sum(-p_target * log_sm)

    # Visit partial: column sums of P_TS for this row block.
    visit_ref[...] = jnp.sum(p_ts, axis=0, keepdims=True)[None]  # (1, 1, M)

    ptst_ref[...] = p_tst
    ptgt_ref[...] = p_target


# ---------------------------------------------------------------------------
# Wrapper
# ---------------------------------------------------------------------------
def semisup_loss(A, B, labels, *, lmbda=LMBDA, block_n=256, block_m=256,
                 mxu_dtype=jnp.bfloat16):
    """A: [N, emb] float32, B: [M, emb] float32, labels: [N] int."""
    A = jnp.asarray(A, jnp.float32)
    B = jnp.asarray(B, jnp.float32)
    N, D = A.shape
    M, D2 = B.shape
    assert D == D2

    # Tile sizes: sublane dim multiple of 8 (16 for the bf16-tiled P_ST output) or full dim.
    tn = _pick_tile(N, block_n, 8)
    tm = _pick_tile(M, block_m, 16 if mxu_dtype == jnp.bfloat16 else 8)
    gn, gm = N // tn, M // tm

    # MXU inputs: bf16 and pre-transposed so both dot_generals contract RHS axis 0
    # (no in-kernel XLU transposes).
    A_mx = A.astype(mxu_dtype)            # [N, D]
    At_mx = A.T.astype(mxu_dtype)         # [D, N]
    B_mx = B.astype(mxu_dtype)            # [M, D]
    Bt_mx = B.T.astype(mxu_dtype)         # [D, M]

    labels_f = labels.astype(jnp.float32)
    lrow = labels_f.reshape(1, N)
    # TODO(synk): the (N, 1) label column pads to 128 lanes in VMEM; negligible here,
    # could be rebuilt in-kernel from lrow with a single XLU transpose per tile.
    lcol = labels_f.reshape(N, 1)

    isz = jnp.dtype(mxu_dtype).itemsize

    # ---- pass 1: P_ST = softmax(B @ A^T, dim=1) ------------------------------------
    est1 = 2 * (tm * D * isz + D * N * isz + tm * N * isz) + 2 * tm * N * 4
    p_st = pl.pallas_call(
        pst_kernel,
        out_shape=jax.ShapeDtypeStruct((M, N), mxu_dtype),
        grid_spec=pltpu.PrefetchScalarGridSpec(
            num_scalar_prefetch=0,
            grid=(gm,),
            in_specs=[pl.BlockSpec((tm, D), lambda i: (i, 0)),   # B row block
                      pl.BlockSpec((D, N), lambda i: (0, 0))],   # A^T (resident)
            out_specs=pl.BlockSpec((tm, N), lambda i: (i, 0))),
        compiler_params=pltpu.CompilerParams(
            dimension_semantics=("parallel",),
            vmem_limit_bytes=_vmem_limit(est1)),
    )(B_mx, At_mx)

    # ---- pass 2: row-blocked walker / visit ----------------------------------------
    est2 = (2 * (tn * D * isz + D * M * isz + M * N * isz + N * 4 + tn * 128 * 4
                 + 2 * tn * N * 4 + 1024 + 8 * M * 4)
            + 2 * tn * M * 4 + 3 * tn * N * 4)
    out_shapes = (jax.ShapeDtypeStruct((N, N), jnp.float32),       # P_TST
                  jax.ShapeDtypeStruct((N, N), jnp.float32),       # p_target
                  jax.ShapeDtypeStruct((gn, 1, 1), jnp.float32),   # walker partials
                  jax.ShapeDtypeStruct((gn, 1, M), jnp.float32))   # visit partials
    p_tst, p_target, walker_parts, visit_parts = pl.pallas_call(
        walker_kernel,
        out_shape=out_shapes,
        grid_spec=pltpu.PrefetchScalarGridSpec(
            num_scalar_prefetch=0,
            grid=(gn,),
            in_specs=[pl.BlockSpec((tn, D), lambda i: (i, 0)),    # A row block
                      pl.BlockSpec((D, M), lambda i: (0, 0)),     # B^T (resident)
                      pl.BlockSpec((M, N), lambda i: (0, 0)),     # P_ST (resident, bf16)
                      pl.BlockSpec((1, N), lambda i: (0, 0)),     # labels row
                      pl.BlockSpec((tn, 1), lambda i: (i, 0))],   # labels column block
            out_specs=[pl.BlockSpec((tn, N), lambda i: (i, 0)),
                       pl.BlockSpec((tn, N), lambda i: (i, 0)),
                       pl.BlockSpec((1, 1, 1), lambda i: (i, 0, 0)),
                       pl.BlockSpec((1, 1, M), lambda i: (i, 0, 0))]),
        compiler_params=pltpu.CompilerParams(
            dimension_semantics=("parallel",),
            vmem_limit_bytes=_vmem_limit(est2)),
    )(A_mx, Bt_mx, p_st, lrow, lcol)

    # ---- tiny XLA epilogue: combine per-block partials ------------------------------
    L_walker = jnp.sum(walker_parts) / N
    p_visit = jnp.sum(visit_parts, axis=(0, 1)) / N                # mean(P_TS, dim=0)
    pv = p_visit + EPS
    L_visit = jnp.sum(-(1.0 / M) * (jnp.log(pv) - jnp.log(jnp.sum(pv))))
    loss = L_walker + lmbda * L_visit
    return loss, p_tst, p_target


# ---------------------------------------------------------------------------
# Pure-JAX reference mirroring the PyTorch forward (matmul inputs cast to the
# same MXU dtype the kernel uses; everything else f32).
# ---------------------------------------------------------------------------
def _soft_xent_ref(inputs, soft_target):
    x = jnp.log(inputs + EPS)
    sm = jax.nn.softmax(x, axis=1)
    return jnp.mean(jnp.sum(-soft_target * jnp.log(sm), axis=1))


def semisup_loss_ref(A, B, labels, lmbda=LMBDA, mxu_dtype=jnp.bfloat16):
    A = jnp.asarray(A, jnp.float32)
    B = jnp.asarray(B, jnp.float32)
    N = A.shape[0]
    M = B.shape[0]
    labels_f = labels.astype(jnp.float32)
    eq = (labels_f[:, None] == labels_f[None, :]).astype(jnp.float32)
    p_target = eq / jnp.sum(eq, axis=1, keepdims=True)
    Am = A.astype(mxu_dtype)
    Bm = B.astype(mxu_dtype)
    Msim = jnp.dot(Am, Bm.T, preferred_element_type=jnp.float32)
    MsimT = jnp.dot(Bm, Am.T, preferred_element_type=jnp.float32)
    P_TS = jax.nn.softmax(Msim, axis=1)
    P_ST = jax.nn.softmax(MsimT, axis=1).astype(mxu_dtype)
    P_TST = jnp.dot(P_TS.astype(mxu_dtype), P_ST, preferred_element_type=jnp.float32)
    L_r = _soft_xent_ref(P_TST, p_target)
    P_visit = jnp.mean(P_TS, axis=0, keepdims=True)
    soft2 = jnp.ones((1, M), jnp.float32) / M
    L_h = _soft_xent_ref(P_visit, soft2)
    return L_r + lmbda * L_h, P_TST, p_target


if __name__ == "__main__":
    key = jax.random.PRNGKey(0)
    N, M, EMB = 64, 128, 32
    kA, kB = jax.random.split(key)
    A = jax.random.normal(kA, (N, EMB), dtype=jnp.float32)
    B = jax.random.normal(kB, (M, EMB), dtype=jnp.float32)
    labels = jnp.arange(N, dtype=jnp.int32) % 8          # [N] class ids

    # Small block sizes so both row-block grids actually take >1 step at demo shapes.
    loss, p_tst, p_target = semisup_loss(A, B, labels, block_n=32, block_m=64)
    jax.block_until_ready((loss, p_tst, p_target))

    loss_r, p_tst_r, p_target_r = semisup_loss_ref(A, B, labels)
    np.testing.assert_allclose(np.asarray(loss), np.asarray(loss_r),
                               rtol=5e-3, atol=5e-4)
    np.testing.assert_allclose(np.asarray(p_tst), np.asarray(p_tst_r),
                               rtol=5e-3, atol=5e-4)
    np.testing.assert_allclose(np.asarray(p_target), np.asarray(p_target_r),
                               rtol=1e-6, atol=1e-6)

    print("KERNEL_OK")
</pallas_src>

<mosaic_0001>
module attributes {stable_mosaic.version = 11 : i64} {
  func.func @pst_kernel(%arg0: i32, %arg1: memref<64x32xbf16, #tpu.memory_space<vmem>>, %arg2: memref<32x64xbf16, #tpu.memory_space<vmem>>, %arg3: memref<64x64xbf16, #tpu.memory_space<vmem>>) attributes {dimension_semantics = [#tpu.dimension_semantics<parallel>], iteration_bounds = array<i64: 2>, scalar_prefetch = 0 : i64, scratch_operands = 0 : i64, tpu.core_type = #tpu.core_type<tc>, window_params = [{transform_indices = @transform_0, window_bounds = array<i64: 64, 32>}, {pipeline_mode = #tpu.pipeline_mode<synchronous>, transform_indices = @transform_1, window_bounds = array<i64: 32, 64>}, {transform_indices = @transform_2, window_bounds = array<i64: 64, 64>}]} {
    %c0 = arith.constant 0 : index
    %c0_0 = arith.constant 0 : index
    %0 = vector.load %arg1[%c0, %c0_0] : memref<64x32xbf16, #tpu.memory_space<vmem>>, vector<64x32xbf16>
    %c0_1 = arith.constant 0 : index
    %c0_2 = arith.constant 0 : index
    %1 = vector.load %arg2[%c0_1, %c0_2] : memref<32x64xbf16, #tpu.memory_space<vmem>>, vector<32x64xbf16>
    %cst = arith.constant dense<0.000000e+00> : vector<64x64xf32>
    %2 = tpu.matmul %0, %1, %cst {dimension_numbers = #tpu.dot_dimension_numbers<[1], [0], [0], [1], [0, 0, 1, 1], [], []>} : vector<64x32xbf16>, vector<32x64xbf16>, vector<64x64xf32> -> vector<64x64xf32>
    %cst_3 = arith.constant dense<0xFF800000> : vector<64xf32>
    %3 = vector.multi_reduction <maximumf>, %2, %cst_3 [1] : vector<64x64xf32> to vector<64xf32>
    %4 = vector.shape_cast %3 : vector<64xf32> to vector<64x1xf32>
    %5 = vector.broadcast %4 : vector<64x1xf32> to vector<64x64xf32>
    %6 = arith.subf %2, %5 : vector<64x64xf32>
    %7 = math.exp %6 : vector<64x64xf32>
    %cst_4 = arith.constant dense<0.000000e+00> : vector<64xf32>
    %8 = vector.multi_reduction <add>, %7, %cst_4 [1] : vector<64x64xf32> to vector<64xf32>
    %9 = vector.shape_cast %8 : vector<64xf32> to vector<64x1xf32>
    %10 = vector.broadcast %9 : vector<64x1xf32> to vector<64x64xf32>
    %11 = arith.divf %7, %10 : vector<64x64xf32>
    %12 = arith.truncf %11 : vector<64x64xf32> to vector<64x64xbf16>
    %c0_5 = arith.constant 0 : index
    %c0_6 = arith.constant 0 : index
    %13 = vector.load %arg3[%c0_5, %c0_6] : memref<64x64xbf16, #tpu.memory_space<vmem>>, vector<64x64xbf16>
    tpu.vector_store %arg3[%c0_5, %c0_6], %12 {strides = array<i32>} : memref<64x64xbf16, #tpu.memory_space<vmem>>, vector<64x64xbf16>,
    return
  }
  func.func @transform_0(%arg0: i32) -> (i32, i32) {
    %c0_i32 = arith.constant 0 : i32
    %c0_i32_0 = arith.constant 0 : i32
    return %arg0, %c0_i32 : i32, i32
  }
  func.func @transform_1(%arg0: i32) -> (i32, i32) {
    %c0_i32 = arith.constant 0 : i32
    %c0_i32_0 = arith.constant 0 : i32
    %c0_i32_1 = arith.constant 0 : i32
    return %c0_i32, %c0_i32_0 : i32, i32
  }
  func.func @transform_2(%arg0: i32) -> (i32, i32) {
    %c0_i32 = arith.constant 0 : i32
    %c0_i32_0 = arith.constant 0 : i32
    return %arg0, %c0_i32 : i32, i32
  }
}

</mosaic_0001>

<llo_original>
// kernel: tpu_custom_call.1
$region0: #{tpu_custom_call.1}
  #allocation0 [shape = 'u32[]', space=smem, size = 0x4, offset = 0x4, fixed_abs, tag = 'smem constant byte address 0x4 - core index']
  #allocation1 [shape = 'u32[144,128]{1,0:T(1,128)}', space=vmem, size = 0x12000, scoped, tag = 'internal scratch']
  %s0 = inlined_call_operand.vmem [shape: bf16[128,32], index: 0, kind: input, shape index: {}]
  %s1 = inlined_call_operand.vmem [shape: bf16[32,64], index: 1, kind: input, shape index: {}]
  %s2 = inlined_call_operand.vmem [shape: bf16[128,64], index: 2, kind: output, shape index: {}]
  %s3 = sld [smem:[#allocation0]]
  $region41: #{tpu_custom_call.1} parent=0
    _
  %s5 = ssub.s32 1, %s3
  %s6 = scalar_select 0, %s5, %s3
  loop: start=0, step=1, limit=4
  $region2: #{tpu_custom_call.1} parent=0 // loop_pre_header
    _
  $region3: #{tpu_custom_call.1} parent=0 // loop_header
    %s8 = sphi 0, %s12
    %p9 = scmp.ge.s32.totalorder %s8, 4
    %s18 = sphi 0, %s20
    %s21 = sphi 0, %s18
    %s22 = sphi 0, %s21
    %s38 = sphi 0, %s22
    %s42 = sphi 0, %s42
    %s44 = sphi 0, %s42
    %s45 = sphi 0, %s44
    %s59 = sphi 0, %s45
    %s65 = sphi 0, %s67
    %s68 = sphi 0, %s65
    %s69 = sphi 0, %s68
    %s85 = sphi 0, %s69
  $region4: #{tpu_custom_call.1} parent=0 // loop_header_branch
    %11 = sbr.rel (%p9) target = $region8
  $region5: #{tpu_custom_call.1} parent=0 // loop_body
    %s13 = ssub.s32 %s8, 1
    %s14 = ssub.s32 %s8, 2
    %s15 = sadd.s32 %s8, 1
    %s16 = ssub.s32 %s8, %s15
    %p17 = scmp.eq.s32.totalorder %s16, 0
    %s19 = sadd.s32 %s18, 1
    %s20 = scalar_select %p17, %s18, %s19
    %p23 = pneg %p17
    %p24 = scmp.eq.s32.totalorder %s8, 1
    %p25 = por %p23, %p24
    %p26 = scmp.ne.s32.totalorder %s18, %s21
    %p27 = scmp.eq.s32.totalorder %s8, 0
    %p28 = por %p26, %p27
    %p29 = scmp.ne.s32.totalorder %s18, %s21
    %p30 = scmp.eq.s32.totalorder %s13, 1
    %p31 = por %p29, %p30
    %p32 = scmp.ne.s32.totalorder %s21, %s22
    %p33 = scmp.eq.s32.totalorder %s13, 0
    %p34 = por %p32, %p33
    %p35 = scmp.ne.s32.totalorder %s21, %s22
    %p36 = scmp.eq.s32.totalorder %s14, 1
    %p37 = por %p35, %p36
    %p39 = scmp.ne.s32.totalorder %s22, %s38
    %p40 = scmp.eq.s32.totalorder %s14, 0
    %p41 = por %p39, %p40
    %s43 = sadd.s32 %s42, 1
    %p46 = scmp.eq.s32.totalorder %s8, 1
    %p47 = scmp.ne.s32.totalorder %s42, %s44
    %p48 = scmp.eq.s32.totalorder %s8, 0
    %p49 = por %p47, %p48
    %p50 = scmp.ne.s32.totalorder %s42, %s44
    %p51 = scmp.eq.s32.totalorder %s13, 1
    %p52 = por %p50, %p51
    %p53 = scmp.ne.s32.totalorder %s44, %s45
    %p54 = scmp.eq.s32.totalorder %s13, 0
    %p55 = por %p53, %p54
    %p56 = scmp.ne.s32.totalorder %s44, %s45
    %p57 = scmp.eq.s32.totalorder %s14, 1
    %p58 = por %p56, %p57
    %p60 = scmp.ne.s32.totalorder %s45, %s59
    %p61 = scmp.eq.s32.totalorder %s14, 0
    %p62 = por %p60, %p61
    %s63 = ssub.s32 %s8, %s15
    %p64 = scmp.eq.s32.totalorder %s63, 0
    %s66 = sadd.s32 %s65, 1
    %s67 = scalar_select %p64, %s65, %s66
    %p70 = pneg %p64
    %p71 = scmp.eq.s32.totalorder %s8, 1
    %p72 = por %p70, %p71
    %p73 = scmp.ne.s32.totalorder %s65, %s68
    %p74 = scmp.eq.s32.totalorder %s8, 0
    %p75 = por %p73, %p74
    %p76 = scmp.ne.s32.totalorder %s65, %s68
    %p77 = scmp.eq.s32.totalorder %s13, 1
    %p78 = por %p76, %p77
    %p79 = scmp.ne.s32.totalorder %s68, %s69
    %p80 = scmp.eq.s32.totalorder %s13, 0
    %p81 = por %p79, %p80
    %p82 = scmp.ne.s32.totalorder %s68, %s69
    %p83 = scmp.eq.s32.totalorder %s14, 1
    %p84 = por %p82, %p83
    %p86 = scmp.ne.s32.totalorder %s69, %s85
    %p87 = scmp.eq.s32.totalorder %s14, 0
    %p88 = por %p86, %p87
    %p89 = scmp.le.s32.totalorder 1, %s8
    %p90 = scmp.lt.s32.totalorder %s8, 3
    %p91 = pnand %p89, %p90
    %p92 = pneg %p91
    // Predicated region
    $region9: #{tpu_custom_call.1} parent=5 // pred_check
      _
    $region10: #{tpu_custom_call.1} parent=5 // pred_check_branch
      %94 = sbr.rel (%p91) target = $region12
    $region11: #{tpu_custom_call.1} parent=5 // pred_region
      %s95 = ssub.s32 %s8, 1
      // Predicated region
      $region13: #{tpu_custom_call.1} parent=11 // pred_check
        %p96 = pneg %p55
      $region14: #{tpu_custom_call.1} parent=11 // pred_check_branch
        %98 = sbr.rel (%p96) target = $region16
      $region15: #{tpu_custom_call.1} parent=11 // pred_region
        _
      $region16: #{tpu_custom_call.1} parent=11 // pred_fallthru
        _
    $region12: #{tpu_custom_call.1} parent=5 // pred_fallthru
      _
    %p99 = scmp.lt.s32.totalorder %s8, 2
    // Predicated region
    $region17: #{tpu_custom_call.1} parent=5 // pred_check
      %p100 = pneg %p99
    $region18: #{tpu_custom_call.1} parent=5 // pred_check_branch
      %102 = sbr.rel (%p100) target = $region20
    $region19: #{tpu_custom_call.1} parent=5 // pred_region
      // Predicated region
      $region21: #{tpu_custom_call.1} parent=19 // pred_check
        %p103 = pneg %p28
      $region22: #{tpu_custom_call.1} parent=19 // pred_check_branch
        %105 = sbr.rel (%p103) target = $region24
      $region23: #{tpu_custom_call.1} parent=19 // pred_region
        %s106 = smul.u32 8, %s8
        %p107 = scmp.lt.s32.totalorder %s106, 15
        %s108 = scalar_select %p107, %s106, 15
        %s109 = smul.addr %s108, 4
        %s110 = scalar_lea.vmem %s0, %s109
        %s111 = smul.u32 8, %s8
      $region24: #{tpu_custom_call.1} parent=19 // pred_fallthru
        _
    $region20: #{tpu_custom_call.1} parent=5 // pred_fallthru
      _
    %p112 = scmp.le.s32.totalorder 1, %s8
    %p113 = scmp.lt.s32.totalorder %s8, 3
    %p114 = pnand %p112, %p113
    %p115 = pneg %p114
    // Predicated region
    $region25: #{tpu_custom_call.1} parent=5 // pred_check
      _
    $region26: #{tpu_custom_call.1} parent=5 // pred_check_branch
      %117 = sbr.rel (%p114) target = $region28
    $region27: #{tpu_custom_call.1} parent=5 // pred_region
      %s118 = ssub.s32 %s8, 1
      %s119 = smul.u32 8, %s13
      %p120 = scmp.lt.s32.totalorder %s119, 15
      %s121 = scalar_select %p120, %s119, 15
      %s122 = smul.addr %s121, 4
      %s123 = scalar_lea.vmem %s0, %s122
      %p124 = pneg %p34
      %p125 = pneg %p31
      %p126 = pneg %p55
      %p127 = pneg %p52
      %p128 = pneg %p81
      %p129 = pneg %p78
      %s130 = smul.u32 8, %s13
      %p131 = scmp.lt.s32.totalorder %s130, 15
      %s132 = scalar_select %p131, %s130, 15
      %s133 = smul.addr %s132, 4
      %s134 = scalar_lea.vmem %s2, %s133
      %s135 = smul.u32 8, %s13
      %p136 = scmp.lt.s32.totalorder %s135, 15
      %s137 = scalar_select %p136, %s135, 15
      %s138 = smul.addr %s137, 4
      %s139 = scalar_lea.vmem %s0, %s138
      %s140 = smul.u32 8, %s13
      %s141 = smul.u32 8, %s13
      %p142 = scmp.lt.s32.totalorder %s141, 15
      %s143 = scalar_select %p142, %s141, 15
      %s144 = smul.addr %s143, 4
      %s145 = scalar_lea.vmem %s2, %s144
      %s146 = smul.u32 8, %s13
      %v148 = vld [vmem:[%s139] sm:$0xf]
      %v149 = vld [vmem:[%s139 + $0x4] sm:$0xf]
      %v150 = vld [vmem:[%s139 + $0x8] sm:$0xf]
      %v151 = vld [vmem:[%s139 + $0xc] sm:$0xf]
      %v152 = vld [vmem:[%s139 + $0x10] sm:$0xf]
      %v153 = vld [vmem:[%s139 + $0x14] sm:$0xf]
      %v154 = vld [vmem:[%s139 + $0x18] sm:$0xf]
      %v155 = vld [vmem:[%s139 + $0x1c] sm:$0xf]
      %v156 = vld [vmem:[%s1] sm:$0xf]
      %v157 = vld [vmem:[%s1 + $0x4] sm:$0xf]
      %v158 = vld [vmem:[%s1 + $0x8] sm:$0xf]
      %v159 = vld [vmem:[%s1 + $0xc] sm:$0xf]
      %v168 = vunpack.c.l.b16 %v148
      %v169 = vunpack.c.l.b16 %v149
      %v170 = vunpack.c.l.b16 %v150
      %v171 = vunpack.c.l.b16 %v151
      %v172 = vunpack.c.l.b16 %v152
      %v173 = vunpack.c.l.b16 %v153
      %v174 = vunpack.c.l.b16 %v154
      %v175 = vunpack.c.l.b16 %v155
      %v176 = vpack.c.b16 %v169, %v168
      %v177 = vpack.c.b16 %v171, %v170
      %v178 = vpack.c.b16 %v173, %v172
      %v179 = vpack.c.b16 %v175, %v174
      %v184 = vunpack.c.l.b16 %v156
      %v185 = vunpack.c.l.b16 %v157
      %v186 = vunpack.c.l.b16 %v158
      %v187 = vunpack.c.l.b16 %v159
      %v188 = vpack.c.b16 %v185, %v184
      %v189 = vpack.c.b16 %v187, %v186
      %vm192 = vcmask 261120
      %v194 = vsel %vm192, %v176, 0
      %v197 = vsel %vm192, %v177, 0
      %v200 = vsel %vm192, %v178, 0
      %v203 = vsel %vm192, %v179, 0
      %205 = vmatprep.subr.bf16.mxu0 0
      %206 = vmatpush1.bf16.msra.mxu0 %v188
      %207 = vmatprep.subr.bf16.mxu0 0
      %208 = vmatpush1.bf16.msra.mxu0 %v189
      %209 = vmatprep.subr.bf16.mxu0 0
      %210 = vmatpush1.bf16.msra.mxu0 0
      %211 = vmatprep.subr.bf16.mxu0 0
      %212 = vmatpush1.bf16.msra.mxu0 0
      %213 = vmatprep.subr.bf16.mxu0 0
      %214 = vmatpush1.bf16.msra.mxu0 0
      %215 = vmatprep.subr.bf16.mxu0 0
      %216 = vmatpush1.bf16.msra.mxu0 0
      %217 = vmatprep.subr.bf16.mxu0 0
      %218 = vmatpush1.bf16.msra.mxu0 0
      %219 = vmatprep.subr.bf16.mxu0 0
      %220 = vmatpush1.bf16.msra.mxu0 0
      %221 = vmatprep.subr.bf16.mxu0 0
      %222 = vmatpush1.bf16.msra.mxu0 0
      %223 = vmatprep.subr.bf16.mxu0 0
      %224 = vmatpush1.bf16.msra.mxu0 0
      %225 = vmatprep.subr.bf16.mxu0 0
      %226 = vmatpush1.bf16.msra.mxu0 0
      %227 = vmatprep.subr.bf16.mxu0 0
      %228 = vmatpush1.bf16.msra.mxu0 0
      %229 = vmatprep.subr.bf16.mxu0 0
      %230 = vmatpush1.bf16.msra.mxu0 0
      %231 = vmatprep.subr.bf16.mxu0 0
      %232 = vmatpush1.bf16.msra.mxu0 0
      %233 = vmatprep.subr.bf16.mxu0 0
      %234 = vmatpush1.bf16.msra.mxu0 0
      %235 = vmatprep.subr.bf16.mxu0 0
      %236 = vmatpush1.bf16.msra.mxu0 0
      %237 = vmatprep.mubr.bf16.mxu0 0
      %238 = vmatmul.mubr.bf16.gmra.mrb[0].mxu0 %v194
      %v239 = vpop.f32.mrb[0].mxu0
      %v240 = vadd.f32 0.0, %v239
      %v241 = vpop.f32.mrb[0].mxu0
      %v242 = vpop.f32.mrb[0].mxu0
      %v243 = vadd.f32 0.0, %v242
      %v244 = vpop.f32.mrb[0].mxu0
      %245 = vmatprep.mubr.bf16.mxu0 0
      %246 = vmatmul.mubr.bf16.gmra.mrb[0].mxu0 %v197
      %v247 = vpop.f32.mrb[0].mxu0
      %v248 = vadd.f32 0.0, %v247
      %v249 = vpop.f32.mrb[0].mxu0
      %v250 = vpop.f32.mrb[0].mxu0
      %v251 = vadd.f32 0.0, %v250
      %v252 = vpop.f32.mrb[0].mxu0
      %253 = vmatprep.mubr.bf16.mxu0 0
      %254 = vmatmul.mubr.bf16.gmra.mrb[0].mxu0 %v200
      %v255 = vpop.f32.mrb[0].mxu0
      %v256 = vadd.f32 0.0, %v255
      %v257 = vpop.f32.mrb[0].mxu0
      %v258 = vpop.f32.mrb[0].mxu0
      %v259 = vadd.f32 0.0, %v258
      %v260 = vpop.f32.mrb[0].mxu0
      %261 = vmatprep.mubr.bf16.mxu0 0
      %262 = vmatmul.mubr.bf16.gmra.mrb[0].mxu0 %v203
      %v263 = vpop.f32.mrb[0].mxu0
      %v264 = vadd.f32 0.0, %v263
      %v265 = vpop.f32.mrb[0].mxu0
      %v266 = vpop.f32.mrb[0].mxu0
      %v267 = vadd.f32 0.0, %v266
      %v268 = vpop.f32.mrb[0].mxu0
      %269 = vdwg.mxu0
      %vm270 = vcmask 523264
      %v271 = vsel %vm270, %v240, -inf
      %272 = vmax.xlane.f32.xlu0 %v271
      %v273 = vpop.xlane.xlu0 %272
      %v274 = vsel %vm270, %v243, -inf
      %275 = vmax.xlane.f32.xlu0 %v274
      %v276 = vpop.xlane.xlu0 %275
      %v277 = vsel %vm270, %v248, -inf
      %278 = vmax.xlane.f32.xlu0 %v277
      %v279 = vpop.xlane.xlu0 %278
      %v280 = vsel %vm270, %v251, -inf
      %281 = vmax.xlane.f32.xlu0 %v280
      %v282 = vpop.xlane.xlu0 %281
      %v283 = vsel %vm270, %v256, -inf
      %284 = vmax.xlane.f32.xlu0 %v283
      %v285 = vpop.xlane.xlu0 %284
      %v286 = vsel %vm270, %v259, -inf
      %287 = vmax.xlane.f32.xlu0 %v286
      %v288 = vpop.xlane.xlu0 %287
      %v289 = vsel %vm270, %v264, -inf
      %290 = vmax.xlane.f32.xlu0 %v289
      %v291 = vpop.xlane.xlu0 %290
      %v292 = vsel %vm270, %v267, -inf
      %293 = vmax.xlane.f32.xlu0 %v292
      %v294 = vpop.xlane.xlu0 %293
      %v295 = vsub.f32 %v240, %v273
      %v296 = vsub.f32 %v243, %v276
      %v297 = vsub.f32 %v248, %v279
      %v298 = vsub.f32 %v251, %v282
      %v299 = vsub.f32 %v256, %v285
      %v300 = vsub.f32 %v259, %v288
      %v301 = vsub.f32 %v264, %v291
      %v302 = vsub.f32 %v267, %v294
      %v303 = vmul.f32 %v295, 1.442695
      %v304 = vpow.pop %v303
      %v305 = vmul.f32 %v296, 1.442695
      %v306 = vpow.pop %v305
      %v307 = vmul.f32 %v297, 1.442695
      %v308 = vpow.pop %v307
      %v309 = vmul.f32 %v298, 1.442695
      %v310 = vpow.pop %v309
      %v311 = vmul.f32 %v299, 1.442695
      %v312 = vpow.pop %v311
      %v313 = vmul.f32 %v300, 1.442695
      %v314 = vpow.pop %v313
      %v315 = vmul.f32 %v301, 1.442695
      %v316 = vpow.pop %v315
      %v317 = vmul.f32 %v302, 1.442695
      %v318 = vpow.pop %v317
      %v319 = vsel %vm270, %v304, 0.0
      %320 = vadd.xlane.f32.xlu0 %v319
      %v321 = vpop.xlane.xlu0 %320
      %v322 = vsel %vm270, %v306, 0.0
      %323 = vadd.xlane.f32.xlu0 %v322
      %v324 = vpop.xlane.xlu0 %323
      %v325 = vsel %vm270, %v308, 0.0
      %326 = vadd.xlane.f32.xlu0 %v325
      %v327 = vpop.xlane.xlu0 %326
      %v328 = vsel %vm270, %v310, 0.0
      %329 = vadd.xlane.f32.xlu0 %v328
      %v330 = vpop.xlane.xlu0 %329
      %v331 = vsel %vm270, %v312, 0.0
      %332 = vadd.xlane.f32.xlu0 %v331
      %v333 = vpop.xlane.xlu0 %332
      %v334 = vsel %vm270, %v314, 0.0
      %335 = vadd.xlane.f32.xlu0 %v334
      %v336 = vpop.xlane.xlu0 %335
      %v337 = vsel %vm270, %v316, 0.0
      %338 = vadd.xlane.f32.xlu0 %v337
      %v339 = vpop.xlane.xlu0 %338
      %v340 = vsel %vm270, %v318, 0.0
      %341 = vadd.xlane.f32.xlu0 %v340
      %v342 = vpop.xlane.xlu0 %341
      %v343 = vrcp.pop %v321
      %v344 = vmul.f32 %v304, %v343
      %v345 = vrcp.pop %v324
      %v346 = vmul.f32 %v306, %v345
      %v347 = vrcp.pop %v327
      %v348 = vmul.f32 %v308, %v347
      %v349 = vrcp.pop %v330
      %v350 = vmul.f32 %v310, %v349
      %v351 = vrcp.pop %v333
      %v352 = vmul.f32 %v312, %v351
      %v353 = vrcp.pop %v336
      %v354 = vmul.f32 %v314, %v353
      %v355 = vrcp.pop %v339
      %v356 = vmul.f32 %v316, %v355
      %v357 = vrcp.pop %v342
      %v358 = vmul.f32 %v318, %v357
      %v359 = vpack.c.bf16 %v346, %v344
      %v360 = vpack.c.bf16 %v350, %v348
      %v361 = vpack.c.bf16 %v354, %v352
      %v362 = vpack.c.bf16 %v358, %v356
      %v367 = vunpack.c.l.b16 %v359
      %v368 = vunpack.c.h.b16 %v359
      %v369 = vunpack.c.l.b16 %v360
      %v370 = vunpack.c.h.b16 %v360
      %v371 = vunpack.c.l.b16 %v361
      %v372 = vunpack.c.h.b16 %v361
      %v373 = vunpack.c.l.b16 %v362
      %v374 = vunpack.c.h.b16 %v362
      %v375 = vpack.c.b16 %v367, %v367
      %v376 = vpack.c.b16 %v368, %v368
      %v377 = vpack.c.b16 %v369, %v369
      %v378 = vpack.c.b16 %v370, %v370
      %v379 = vpack.c.b16 %v371, %v371
      %v380 = vpack.c.b16 %v372, %v372
      %v381 = vpack.c.b16 %v373, %v373
      %v382 = vpack.c.b16 %v374, %v374
      %vm391 = vcmask 519168
      %392 = vst.msk [vmem:[%s145] sm:$0xf] %vm391, %v375
      %393 = vst.msk [vmem:[%s145 + $0x4] sm:$0xf] %vm391, %v376
      %394 = vst.msk [vmem:[%s145 + $0x8] sm:$0xf] %vm391, %v377
      %395 = vst.msk [vmem:[%s145 + $0xc] sm:$0xf] %vm391, %v378
      %396 = vst.msk [vmem:[%s145 + $0x10] sm:$0xf] %vm391, %v379
      %397 = vst.msk [vmem:[%s145 + $0x14] sm:$0xf] %vm391, %v380
      %398 = vst.msk [vmem:[%s145 + $0x18] sm:$0xf] %vm391, %v381
      %399 = vst.msk [vmem:[%s145 + $0x1c] sm:$0xf] %vm391, %v382
      %s400 = smul.u32 8, %s13
      %p401 = scmp.lt.s32.totalorder %s400, 15
      %s402 = scalar_select %p401, %s400, 15
      %s403 = smul.addr %s402, 4
      %s404 = scalar_lea.vmem %s2, %s403
      // Predicated region
      $region29: #{tpu_custom_call.1} parent=27 // pred_check
        %p405 = pneg %p78
      $region30: #{tpu_custom_call.1} parent=27 // pred_check_branch
        %407 = sbr.rel (%p405) target = $region32
      $region31: #{tpu_custom_call.1} parent=27 // pred_region
        %s408 = smul.u32 8, %s13
      $region32: #{tpu_custom_call.1} parent=27 // pred_fallthru
        _
    $region28: #{tpu_custom_call.1} parent=5 // pred_fallthru
      _
    %p409 = scmp.le.s32.totalorder 2, %s8
    // Predicated region
    $region33: #{tpu_custom_call.1} parent=5 // pred_check
      %p410 = pneg %p409
    $region34: #{tpu_custom_call.1} parent=5 // pred_check_branch
      %412 = sbr.rel (%p410) target = $region36
    $region35: #{tpu_custom_call.1} parent=5 // pred_region
      %s413 = ssub.s32 %s8, 2
      // Predicated region
      $region37: #{tpu_custom_call.1} parent=35 // pred_check
        %p414 = pneg %p84
      $region38: #{tpu_custom_call.1} parent=35 // pred_check_branch
        %416 = sbr.rel (%p414) target = $region40
      $region39: #{tpu_custom_call.1} parent=35 // pred_region
        %s417 = smul.u32 8, %s14
        %p418 = scmp.lt.s32.totalorder %s417, 15
        %s419 = scalar_select %p418, %s417, 15
        %s420 = smul.addr %s419, 4
        %s421 = scalar_lea.vmem %s2, %s420
      $region40: #{tpu_custom_call.1} parent=35 // pred_fallthru
        _
    $region36: #{tpu_custom_call.1} parent=5 // pred_fallthru
      _
  $region6: #{tpu_custom_call.1} parent=0 // loop_footer
    %s12 = sadd.s32 1, %s8
  $region7: #{tpu_custom_call.1} parent=0 // loop_footer_branch
    %7 = sbr.rel target = $region3
  $region8: #{tpu_custom_call.1} parent=0 // loop_exit
    _

</llo_original>
